<compile_context>
chip_gen: v5e
topology: v5e:2x2
jax: 0.10.0
libtpu: 0.0.40
codegen_flags: <defaults>
</compile_context>

<pallas_src>
import jax
import jax.numpy as jnp
from jax.experimental import pallas as pl
from jax.experimental.pallas import tpu as pltpu


def _mul_conv1x1_kernel(s_ref, x_ref, w_ref, o_ref):
    # s_ref: (1, Cin)       per-sample per-channel scale (lane-dense)
    # x_ref: (Cin, HW)      activations for this sample (NCHW-native, spatial flat)
    # w_ref: (Cout_t, Cin)  weight tile
    # o_ref: (Cout_t, HW)
    w_scaled = w_ref[...] * s_ref[...]                  # VPU sublane broadcast: (W*s)
    o_ref[...] = jnp.dot(                               # 1x1 conv == channel matmul (MXU)
        w_scaled, x_ref[...], preferred_element_type=jnp.float32
    ).astype(o_ref.dtype)


def mul_conv2d_1x1(x441, x436, weight, *, cout_tiles=2):
    """x441: [N,Cin,1,1], x436: [N,Cin,H,W], weight: [Cout,Cin,1,1] (torch conv layout).
    Returns [N,Cout,H,W] (NCHW), matching the PyTorch module semantics."""
    N, Cin, H, W = x436.shape
    Cout = weight.shape[0]
    HW = H * W

    # Tile width must divide Cout and be a multiple of 8 sublanes; otherwise single tile.
    if Cout % cout_tiles != 0 or (Cout // cout_tiles) % 8 != 0:
        cout_tiles = 1
    tc = Cout // cout_tiles

    # All free, contiguous reshapes (no HBM traffic).
    x = x436.reshape(N, Cin, HW)          # (N, Cin, HW)
    s = x441.reshape(N, 1, Cin)           # (N, 1, Cin)  lane-dense per-sample scale
    w = weight.reshape(Cout, Cin)         # (Cout, Cin)  — no transpose needed

    out = pl.pallas_call(
        _mul_conv1x1_kernel,
        out_shape=jax.ShapeDtypeStruct((N, Cout, HW), x436.dtype),
        grid_spec=pltpu.PrefetchScalarGridSpec(
            num_scalar_prefetch=0,
            grid=(N, cout_tiles),
            in_specs=[
                # scale: one (1, Cin) row per sample, constant across Cout tiles
                pl.BlockSpec((None, 1, Cin), lambda n, t: (n, 0, 0)),
                # activations: one (Cin, HW) slab per sample, constant across Cout tiles
                # (same block index across t -> fetched once per sample)
                pl.BlockSpec((None, Cin, HW), lambda n, t: (n, 0, 0)),
                # weight: tiled along Cout so its DMA pipelines / splits across cores
                pl.BlockSpec((tc, Cin), lambda n, t: (t, 0)),
            ],
            out_specs=pl.BlockSpec((None, tc, HW), lambda n, t: (n, t, 0)),
        ),
        compiler_params=pltpu.CompilerParams(
            # every output block is written exactly once -> both axes parallel
            # (lets Mosaic shard the Cout tiles across the two TCs on v7x).
            dimension_semantics=("parallel", "parallel"),
            vmem_limit_bytes=64 << 20,
        ),
    )(s, x, w)

    return out.reshape(N, Cout, H, W)     # free reshape back to NCHW


def _reference(x441, x436, weight):
    Cout, Cin = weight.shape[0], weight.shape[1]
    x442 = x441 * x436
    return jnp.einsum("nchw,oc->nohw", x442, weight.reshape(Cout, Cin))


if __name__ == "__main__":
    key = jax.random.PRNGKey(0)
    k1, k2, k3, k4, k5, k6 = jax.random.split(key, 6)

    # --- Small-shape check (batch=2, verifies per-sample scale handling) ---
    N, Cin, H, W, Cout = 2, 32, 5, 5, 16
    x436_s = jax.random.normal(k1, (N, Cin, H, W), dtype=jnp.float32)
    x441_s = jax.random.normal(k2, (N, Cin, 1, 1), dtype=jnp.float32)
    weight_s = jax.random.normal(k3, (Cout, Cin, 1, 1), dtype=jnp.float32) * 0.05

    out_s = jax.block_until_ready(mul_conv2d_1x1(x441_s, x436_s, weight_s))
    ref_s = _reference(x441_s, x436_s, weight_s)
    assert out_s.shape == (N, Cout, H, W)
    assert jnp.allclose(out_s, ref_s, atol=1e-3, rtol=1e-3)

    # --- Module-spec shapes: x436 [1,1824,7,7], x441 [1,1824,1,1], conv 1824->304 ---
    N2, Cin2, H2, W2, Cout2 = 1, 1824, 7, 7, 304
    x436_f = jax.random.normal(k4, (N2, Cin2, H2, W2), dtype=jnp.float32)
    x441_f = jax.random.normal(k5, (N2, Cin2, 1, 1), dtype=jnp.float32)
    weight_f = jax.random.normal(k6, (Cout2, Cin2, 1, 1), dtype=jnp.float32) * 0.02

    out_f = jax.block_until_ready(mul_conv2d_1x1(x441_f, x436_f, weight_f))
    ref_f = _reference(x441_f, x436_f, weight_f)
    assert out_f.shape == (N2, Cout2, H2, W2)
    assert jnp.allclose(out_f, ref_f, atol=2e-3, rtol=2e-3)

    print("KERNEL_OK")
</pallas_src>

<mosaic_0001>
module attributes {stable_mosaic.version = 11 : i64} {
  func.func @_mul_conv1x1_kernel(%arg0: i32, %arg1: i32, %arg2: memref<1x1x32xf32, #tpu.memory_space<vmem>>, %arg3: memref<1x32x25xf32, #tpu.memory_space<vmem>>, %arg4: memref<8x32xf32, #tpu.memory_space<vmem>>, %arg5: memref<1x8x25xf32, #tpu.memory_space<vmem>>) attributes {dimension_semantics = [#tpu.dimension_semantics<parallel>, #tpu.dimension_semantics<parallel>], iteration_bounds = array<i64: 2, 2>, scalar_prefetch = 0 : i64, scratch_operands = 0 : i64, tpu.core_type = #tpu.core_type<tc>, window_params = [{transform_indices = @transform_0, window_bounds = array<i64: 1, 1, 32>}, {transform_indices = @transform_1, window_bounds = array<i64: 1, 32, 25>}, {transform_indices = @transform_2, window_bounds = array<i64: 8, 32>}, {transform_indices = @transform_3, window_bounds = array<i64: 1, 8, 25>}]} {
    %c0 = arith.constant 0 : index
    %c0_0 = arith.constant 0 : index
    %0 = vector.load %arg4[%c0, %c0_0] : memref<8x32xf32, #tpu.memory_space<vmem>>, vector<8x32xf32>
    %c0_1 = arith.constant 0 : index
    %c0_2 = arith.constant 0 : index
    %c0_3 = arith.constant 0 : index
    %1 = vector.load %arg2[%c0_1, %c0_2, %c0_3] : memref<1x1x32xf32, #tpu.memory_space<vmem>>, vector<1x1x32xf32>
    %2 = vector.shape_cast %1 : vector<1x1x32xf32> to vector<1x32xf32>
    %3 = vector.broadcast %2 : vector<1x32xf32> to vector<8x32xf32>
    %4 = arith.mulf %0, %3 : vector<8x32xf32>
    %c0_4 = arith.constant 0 : index
    %c0_5 = arith.constant 0 : index
    %c0_6 = arith.constant 0 : index
    %5 = vector.load %arg3[%c0_4, %c0_5, %c0_6] : memref<1x32x25xf32, #tpu.memory_space<vmem>>, vector<1x32x25xf32>
    %6 = vector.shape_cast %5 : vector<1x32x25xf32> to vector<32x25xf32>
    %cst = arith.constant dense<0.000000e+00> : vector<8x25xf32>
    %7 = tpu.matmul %4, %6, %cst {dimension_numbers = #tpu.dot_dimension_numbers<[1], [0], [0], [1], [0, 0, 1, 1], [], []>} : vector<8x32xf32>, vector<32x25xf32>, vector<8x25xf32> -> vector<8x25xf32>
    %c0_7 = arith.constant 0 : index
    %c0_8 = arith.constant 0 : index
    %c0_9 = arith.constant 0 : index
    %8 = vector.load %arg5[%c0_7, %c0_8, %c0_9] : memref<1x8x25xf32, #tpu.memory_space<vmem>>, vector<1x8x25xf32>
    %9 = vector.shape_cast %8 : vector<1x8x25xf32> to vector<8x25xf32>
    %10 = vector.shape_cast %7 : vector<8x25xf32> to vector<1x8x25xf32>
    tpu.vector_store %arg5[%c0_7, %c0_8, %c0_9], %10 {strides = array<i32>} : memref<1x8x25xf32, #tpu.memory_space<vmem>>, vector<1x8x25xf32>,
    return
  }
  func.func @transform_0(%arg0: i32, %arg1: i32) -> (i32, i32, i32) {
    %c0_i32 = arith.constant 0 : i32
    %c0_i32_0 = arith.constant 0 : i32
    %c0_i32_1 = arith.constant 0 : i32
    return %arg0, %c0_i32, %c0_i32_0 : i32, i32, i32
  }
  func.func @transform_1(%arg0: i32, %arg1: i32) -> (i32, i32, i32) {
    %c0_i32 = arith.constant 0 : i32
    %c0_i32_0 = arith.constant 0 : i32
    %c0_i32_1 = arith.constant 0 : i32
    return %arg0, %c0_i32, %c0_i32_0 : i32, i32, i32
  }
  func.func @transform_2(%arg0: i32, %arg1: i32) -> (i32, i32) {
    %c0_i32 = arith.constant 0 : i32
    %c0_i32_0 = arith.constant 0 : i32
    return %arg1, %c0_i32 : i32, i32
  }
  func.func @transform_3(%arg0: i32, %arg1: i32) -> (i32, i32, i32) {
    %c0_i32 = arith.constant 0 : i32
    %c0_i32_0 = arith.constant 0 : i32
    return %arg0, %arg1, %c0_i32 : i32, i32, i32
  }
}

</mosaic_0001>

<llo_original>
// kernel: tpu_custom_call.1
$region0: #{tpu_custom_call.1}
  #allocation0 [shape = 'u32[]', space=smem, size = 0x4, offset = 0x4, fixed_abs, tag = 'smem constant byte address 0x4 - core index']
  #allocation1 [shape = 'u32[72,128]{1,0:T(1,128)}', space=vmem, size = 0x9000, scoped, tag = 'internal scratch']
  %s0 = inlined_call_operand.vmem [shape: f32[2,1,32], index: 0, kind: input, shape index: {}]
  %s1 = inlined_call_operand.vmem [shape: f32[2,32,25], index: 1, kind: input, shape index: {}]
  %s2 = inlined_call_operand.vmem [shape: f32[16,32], index: 2, kind: input, shape index: {}]
  %s3 = inlined_call_operand.hbm [shape: f32[2,16,25], index: 3, kind: output, shape index: {}]
  %s4 = sld [smem:[#allocation0]]
  $region45: #{tpu_custom_call.1} parent=0
    _
  %s6 = ssub.s32 1, %s4
  %s7 = scalar_select 0, %s6, %s4
  $region1: #{tpu_custom_call.1} parent=0
    #allocation2 [shape = 'u8[8192]{0}', space=vmem, size = 0x2000, scoped, tag = 'output window, operand 0']
    #allocation3 [shape = 's32[2]{0}', space=sflag, size = 0x8, scoped, tag = 'scoped memory for tpu_custom_call.1']
    %8 = vsyncpa [#allocation3], 0
    %s9 = scalar_lea.sflag [#allocation3], 1
    %10 = vsyncpa %s9, 0
    loop: start=0, step=1, limit=6
    $region2: #{tpu_custom_call.1} parent=1 // loop_pre_header
      _
    $region3: #{tpu_custom_call.1} parent=1 // loop_header
      %s12 = sphi 0, %s16
      %p13 = scmp.ge.s32.totalorder %s12, 6
      %s19 = sphi 0, %s31
      %s20 = sphi 0, %s27
      %s21 = sphi 0, %s19
      %s22 = sphi 0, %s20
      %s23 = sphi 0, %s21
      %s24 = sphi 0, %s22
      %s34 = sphi 0, %s36
      %s37 = sphi 0, %s34
      %s38 = sphi 0, %s37
      %s54 = sphi 0, %s38
      %s60 = sphi 0, %s62
      %s63 = sphi 0, %s60
      %s64 = sphi 0, %s63
      %s80 = sphi 0, %s64
      %s86 = sphi 0, %s88
      %s89 = sphi 0, %s86
      %s90 = sphi 0, %s89
      %s106 = sphi 0, %s90
      %s114 = sphi 0, %s116
      %s117 = sphi 0, %s114
      %s118 = sphi 0, %s117
      %s134 = sphi 0, %s118
    $region4: #{tpu_custom_call.1} parent=1 // loop_header_branch
      %15 = sbr.rel (%p13) target = $region8
    $region5: #{tpu_custom_call.1} parent=1 // loop_body
      %s17 = ssub.s32 %s12, 1
      %s18 = ssub.s32 %s12, 2
      %s25 = sadd.s32 1, %s20
      %p26 = scmp.ge.s32.totalorder %s25, 2
      %s27 = scalar_select %p26, 0, %s25
      %s28 = sadd.s32 1, %s19
      %s29 = scalar_select %p26, %s28, %s19
      %p30 = scmp.ge.s32.totalorder %s29, 2
      %s31 = scalar_select %p30, 0, %s29
      %s32 = ssub.s32 %s19, %s31
      %p33 = scmp.eq.s32.totalorder %s32, 0
      %s35 = sadd.s32 %s34, 1
      %s36 = scalar_select %p33, %s34, %s35
      %p39 = pneg %p33
      %p40 = scmp.eq.s32.totalorder %s12, 3
      %p41 = por %p39, %p40
      %p42 = scmp.ne.s32.totalorder %s34, %s37
      %p43 = scmp.eq.s32.totalorder %s12, 0
      %p44 = por %p42, %p43
      %p45 = scmp.ne.s32.totalorder %s34, %s37
      %p46 = scmp.eq.s32.totalorder %s17, 3
      %p47 = por %p45, %p46
      %p48 = scmp.ne.s32.totalorder %s37, %s38
      %p49 = scmp.eq.s32.totalorder %s17, 0
      %p50 = por %p48, %p49
      %p51 = scmp.ne.s32.totalorder %s37, %s38
      %p52 = scmp.eq.s32.totalorder %s18, 3
      %p53 = por %p51, %p52
      %p55 = scmp.ne.s32.totalorder %s38, %s54
      %p56 = scmp.eq.s32.totalorder %s18, 0
      %p57 = por %p55, %p56
      %s58 = ssub.s32 %s19, %s31
      %p59 = scmp.eq.s32.totalorder %s58, 0
      %s61 = sadd.s32 %s60, 1
      %s62 = scalar_select %p59, %s60, %s61
      %p65 = pneg %p59
      %p66 = scmp.eq.s32.totalorder %s12, 3
      %p67 = por %p65, %p66
      %p68 = scmp.ne.s32.totalorder %s60, %s63
      %p69 = scmp.eq.s32.totalorder %s12, 0
      %p70 = por %p68, %p69
      %p71 = scmp.ne.s32.totalorder %s60, %s63
      %p72 = scmp.eq.s32.totalorder %s17, 3
      %p73 = por %p71, %p72
      %p74 = scmp.ne.s32.totalorder %s63, %s64
      %p75 = scmp.eq.s32.totalorder %s17, 0
      %p76 = por %p74, %p75
      %p77 = scmp.ne.s32.totalorder %s63, %s64
      %p78 = scmp.eq.s32.totalorder %s18, 3
      %p79 = por %p77, %p78
      %p81 = scmp.ne.s32.totalorder %s64, %s80
      %p82 = scmp.eq.s32.totalorder %s18, 0
      %p83 = por %p81, %p82
      %s84 = ssub.s32 %s20, %s27
      %p85 = scmp.eq.s32.totalorder %s84, 0
      %s87 = sadd.s32 %s86, 1
      %s88 = scalar_select %p85, %s86, %s87
      %p91 = pneg %p85
      %p92 = scmp.eq.s32.totalorder %s12, 3
      %p93 = por %p91, %p92
      %p94 = scmp.ne.s32.totalorder %s86, %s89
      %p95 = scmp.eq.s32.totalorder %s12, 0
      %p96 = por %p94, %p95
      %p97 = scmp.ne.s32.totalorder %s86, %s89
      %p98 = scmp.eq.s32.totalorder %s17, 3
      %p99 = por %p97, %p98
      %p100 = scmp.ne.s32.totalorder %s89, %s90
      %p101 = scmp.eq.s32.totalorder %s17, 0
      %p102 = por %p100, %p101
      %p103 = scmp.ne.s32.totalorder %s89, %s90
      %p104 = scmp.eq.s32.totalorder %s18, 3
      %p105 = por %p103, %p104
      %p107 = scmp.ne.s32.totalorder %s90, %s106
      %p108 = scmp.eq.s32.totalorder %s18, 0
      %p109 = por %p107, %p108
      %s110 = ssub.s32 %s19, %s31
      %s111 = ssub.s32 %s20, %s27
      %s112 = sor.u32 %s110, %s111
      %p113 = scmp.eq.s32.totalorder %s112, 0
      %s115 = sadd.s32 %s114, 1
      %s116 = scalar_select %p113, %s114, %s115
      %p119 = pneg %p113
      %p120 = scmp.eq.s32.totalorder %s12, 3
      %p121 = por %p119, %p120
      %p122 = scmp.ne.s32.totalorder %s114, %s117
      %p123 = scmp.eq.s32.totalorder %s12, 0
      %p124 = por %p122, %p123
      %p125 = scmp.ne.s32.totalorder %s114, %s117
      %p126 = scmp.eq.s32.totalorder %s17, 3
      %p127 = por %p125, %p126
      %p128 = scmp.ne.s32.totalorder %s117, %s118
      %p129 = scmp.eq.s32.totalorder %s17, 0
      %p130 = por %p128, %p129
      %p131 = scmp.ne.s32.totalorder %s117, %s118
      %p132 = scmp.eq.s32.totalorder %s18, 3
      %p133 = por %p131, %p132
      %p135 = scmp.ne.s32.totalorder %s118, %s134
      %p136 = scmp.eq.s32.totalorder %s18, 0
      %p137 = por %p135, %p136
      %p138 = scmp.le.s32.totalorder 1, %s12
      %p139 = scmp.lt.s32.totalorder %s12, 5
      %p140 = pnand %p138, %p139
      %p141 = pneg %p140
      // Predicated region
      $region9: #{tpu_custom_call.1} parent=5 // pred_check
        _
      $region10: #{tpu_custom_call.1} parent=5 // pred_check_branch
        %143 = sbr.rel (%p140) target = $region12
      $region11: #{tpu_custom_call.1} parent=5 // pred_region
        %s144 = ssub.s32 %s12, 1
      $region12: #{tpu_custom_call.1} parent=5 // pred_fallthru
        _
      %p145 = scmp.lt.s32.totalorder %s12, 4
      // Predicated region
      $region13: #{tpu_custom_call.1} parent=5 // pred_check
        %p146 = pneg %p145
      $region14: #{tpu_custom_call.1} parent=5 // pred_check_branch
        %148 = sbr.rel (%p146) target = $region16
      $region15: #{tpu_custom_call.1} parent=5 // pred_region
        // Predicated region
        $region17: #{tpu_custom_call.1} parent=15 // pred_check
          %p149 = pneg %p44
        $region18: #{tpu_custom_call.1} parent=15 // pred_check_branch
          %151 = sbr.rel (%p149) target = $region20
        $region19: #{tpu_custom_call.1} parent=15 // pred_region
          %p152 = scmp.lt.s32.totalorder %s19, 1
          %s153 = scalar_select %p152, %s19, 1
          %s154 = scalar_lea.vmem %s0, %s153
        $region20: #{tpu_custom_call.1} parent=15 // pred_fallthru
          _
        // Predicated region
        $region21: #{tpu_custom_call.1} parent=15 // pred_check
          %p155 = pneg %p70
        $region22: #{tpu_custom_call.1} parent=15 // pred_check_branch
          %157 = sbr.rel (%p155) target = $region24
        $region23: #{tpu_custom_call.1} parent=15 // pred_region
          %p158 = scmp.lt.s32.totalorder %s19, 1
          %s159 = scalar_select %p158, %s19, 1
          %s160 = smul.addr %s159, 4
          %s161 = smul.addr %s160, 8
          %s162 = scalar_lea.vmem %s1, %s161
        $region24: #{tpu_custom_call.1} parent=15 // pred_fallthru
          _
        // Predicated region
        $region25: #{tpu_custom_call.1} parent=15 // pred_check
          %p163 = pneg %p96
        $region26: #{tpu_custom_call.1} parent=15 // pred_check_branch
          %165 = sbr.rel (%p163) target = $region28
        $region27: #{tpu_custom_call.1} parent=15 // pred_region
          %p166 = scmp.lt.s32.totalorder %s20, 1
          %s167 = scalar_select %p166, %s20, 1
          %s168 = smul.addr %s167, 8
          %s169 = scalar_lea.vmem %s2, %s168
        $region28: #{tpu_custom_call.1} parent=15 // pred_fallthru
          _
      $region16: #{tpu_custom_call.1} parent=5 // pred_fallthru
        _
      %p170 = scmp.le.s32.totalorder 1, %s12
      %p171 = scmp.lt.s32.totalorder %s12, 5
      %p172 = pnand %p170, %p171
      %p173 = pneg %p172
      // Predicated region
      $region29: #{tpu_custom_call.1} parent=5 // pred_check
        _
      $region30: #{tpu_custom_call.1} parent=5 // pred_check_branch
        %175 = sbr.rel (%p172) target = $region32
      $region31: #{tpu_custom_call.1} parent=5 // pred_region
        %s176 = ssub.s32 %s12, 1
        %p177 = scmp.lt.s32.totalorder %s21, 1
        %s178 = scalar_select %p177, %s21, 1
        %s179 = scalar_lea.vmem %s0, %s178
        %p180 = pneg %p50
        %p181 = pneg %p47
        %p182 = scmp.lt.s32.totalorder %s21, 1
        %s183 = scalar_select %p182, %s21, 1
        %s184 = smul.addr %s183, 4
        %s185 = smul.addr %s184, 8
        %s186 = scalar_lea.vmem %s1, %s185
        %p187 = pneg %p76
        %p188 = pneg %p73
        %p189 = scmp.lt.s32.totalorder %s22, 1
        %s190 = scalar_select %p189, %s22, 1
        %s191 = smul.addr %s190, 8
        %s192 = scalar_lea.vmem %s2, %s191
        %p193 = pneg %p102
        %p194 = pneg %p99
        %p195 = pneg %p130
        %p196 = pneg %p127
        %s197 = sand.u32 %s117, 1
        %s198 = scalar_lea.sflag [#allocation3], %s197
        %s199 = sand.u32 %s117, 1
        %s200 = smul.addr %s199, 8
        %s201 = scalar_lea.vmem [#allocation2], %s200
        %p202 = scmp.lt.s32.totalorder %s21, 1
        %s203 = scalar_select %p202, %s21, 1
        %s204 = scalar_lea.vmem %s0, %s203
        %p205 = scmp.lt.s32.totalorder %s21, 1
        %s206 = scalar_select %p205, %s21, 1
        %s207 = smul.addr %s206, 4
        %s208 = smul.addr %s207, 8
        %s209 = scalar_lea.vmem %s1, %s208
        %p210 = scmp.lt.s32.totalorder %s22, 1
        %s211 = scalar_select %p210, %s22, 1
        %s212 = smul.addr %s211, 8
        %s213 = scalar_lea.vmem %s2, %s212
        %v214 = vld [vmem:[%s213] sm:$0xff]
        %v215 = vld [vmem:[%s204] sm:$0x1]
        %v217 = vperm.slane %v215, 0
        %v219 = vmul.f32 %v214, %v217
        %v220 = vld [vmem:[%s209] sm:$0xff]
        %v221 = vld [vmem:[%s209 + $0x8] sm:$0xff]
        %v222 = vld [vmem:[%s209 + $0x10] sm:$0xff]
        %v223 = vld [vmem:[%s209 + $0x18] sm:$0xff]
        %vm224 = vcmask 261120
        %v226 = vsel %vm224, %v219, 0
        %228 = vmatpush.msra.mxu0 0.0
        %229 = vmatpush.msra.mxu0 0.0
        %230 = vmatpush.msra.mxu0 0.0
        %231 = vmatpush.msra.mxu0 0.0
        %232 = vmatpush.msra.mxu0 0.0
        %233 = vmatpush.msra.mxu0 0.0
        %234 = vmatpush.msra.mxu0 0.0
        %235 = vmatpush.msra.mxu0 0.0
        %236 = vmatpush.msra.mxu0 0.0
        %237 = vmatpush.msra.mxu0 0.0
        %238 = vmatpush.msra.mxu0 0.0
        %239 = vmatpush.msra.mxu0 0.0
        %240 = vmatpush.msra.mxu0 %v223
        %241 = vmatpush.msra.mxu0 %v222
        %242 = vmatpush.msra.mxu0 %v221
        %243 = vmatpush.msra.mxu0 %v220
        %244 = vmatmul.f32.gmra.mxu0 %v226
        %v245 = vpop.f32.mrf.mxu0
        %v246 = vadd.f32 0.0, %v245
        %247 = vdwg.mxu0
        %vm248 = vcmask 203776
        %249 = vst.msk [vmem:[%s201] sm:$0xff] %vm248, %v246
        %s250 = sand.u32 %s117, 1
        %s251 = scalar_lea.sflag [#allocation3], %s250
        %s252 = sand.u32 %s117, 1
        %s253 = smul.addr %s252, 8
        %s254 = scalar_lea.vmem [#allocation2], %s253
        // Predicated region
        $region33: #{tpu_custom_call.1} parent=31 // pred_check
          %p255 = pneg %p127
        $region34: #{tpu_custom_call.1} parent=31 // pred_check_branch
          %257 = sbr.rel (%p255) target = $region36
        $region35: #{tpu_custom_call.1} parent=31 // pred_region
          %259 = vsyncadd %s251, 0
          %s260 = smul.addr %s21, 2
          %s261 = sadd.s32 %s22, %s260
          %s262 = smul.addr %s261, 8
          %s263 = scalar_lea.hbm %s3, %s262
          %s265 = sshll.u32 %s254, 4
          %s266 = int_to_ptr.vmem [resolvable:$true] %s265
          %s267 = sshll.u32 %s263, 4
          %s268 = int_to_ptr.hbm [resolvable:$true] %s267
          %270 = dma.vmem_to_hbm [thread:$0]  %s266, 128, %s268, %s251
        $region36: #{tpu_custom_call.1} parent=31 // pred_fallthru
          _
      $region32: #{tpu_custom_call.1} parent=5 // pred_fallthru
        _
      %p271 = scmp.le.s32.totalorder 2, %s12
      // Predicated region
      $region37: #{tpu_custom_call.1} parent=5 // pred_check
        %p272 = pneg %p271
      $region38: #{tpu_custom_call.1} parent=5 // pred_check_branch
        %274 = sbr.rel (%p272) target = $region40
      $region39: #{tpu_custom_call.1} parent=5 // pred_region
        %s275 = ssub.s32 %s12, 2
        // Predicated region
        $region41: #{tpu_custom_call.1} parent=39 // pred_check
          %p276 = pneg %p133
        $region42: #{tpu_custom_call.1} parent=39 // pred_check_branch
          %278 = sbr.rel (%p276) target = $region44
        $region43: #{tpu_custom_call.1} parent=39 // pred_region
          %s279 = sand.u32 %s118, 1
          %s280 = scalar_lea.sflag [#allocation3], %s279
          %s281 = sand.u32 %s118, 1
          %s282 = smul.addr %s281, 8
          %s283 = scalar_lea.vmem [#allocation2], %s282
          %285 = dma.done %s280, 128
        $region44: #{tpu_custom_call.1} parent=39 // pred_fallthru
          _
      $region40: #{tpu_custom_call.1} parent=5 // pred_fallthru
        _
    $region6: #{tpu_custom_call.1} parent=1 // loop_footer
      %s16 = sadd.s32 1, %s12
    $region7: #{tpu_custom_call.1} parent=1 // loop_footer_branch
      %11 = sbr.rel target = $region3
    $region8: #{tpu_custom_call.1} parent=1 // loop_exit
      _
    %286 = vsyncpa [#allocation3], 1
    %s287 = scalar_lea.sflag [#allocation3], 1
    %288 = vsyncpa %s287, 1

</llo_original>
